<compile_context>
chip_gen: v6e
topology: v6e:2x2x1
jax: 0.10.0
libtpu: 0.0.40
codegen_flags: <defaults>
</compile_context>

<pallas_src>
import jax
import jax.numpy as jnp
from jax import lax
from jax.experimental import pallas as pl
from jax.experimental.pallas import tpu as pltpu


def basic_block_kernel(x_ref, w1_ref, s1_ref, b1_ref, w2_ref, s2_ref, b2_ref,
                       out_ref, xpad_ref, mid_ref):
    # x_ref:   (Bt, H, W*Cin)        f32   lane-dense input (also the shortcut)
    # w1_ref:  (3, W*Cin, W*Cmid)    bf16  banded conv1 weights (one per kh tap)
    # s1/b1:   (1, W*Cmid)           f32   folded BN1 scale / bias (tiled per w)
    # w2_ref:  (3, W*Cmid, W*Cout)   bf16  banded conv2 weights
    # s2/b2:   (1, W*Cout)           f32   folded BN2 scale / bias
    # out_ref: (Bt, H, W*Cout)       f32
    # scratch: xpad (Bt, H+2, W*Cin) bf16, mid (Bt, H+2, W*Cmid) bf16
    Bt, H, WCin = x_ref.shape
    WCmid = s1_ref.shape[1]
    WCout = out_ref.shape[2]

    # Zero only the 1-row top/bottom halos (interiors are fully overwritten).
    xpad_ref[:, 0:1, :] = jnp.zeros((Bt, 1, WCin), jnp.bfloat16)
    xpad_ref[:, H + 1:H + 2, :] = jnp.zeros((Bt, 1, WCin), jnp.bfloat16)
    mid_ref[:, 0:1, :] = jnp.zeros((Bt, 1, WCmid), jnp.bfloat16)
    mid_ref[:, H + 1:H + 2, :] = jnp.zeros((Bt, 1, WCmid), jnp.bfloat16)

    # ---- conv1: 3 accumulated matmuls over the kh taps, K = W*Cin ----------
    xpad_ref[:, 1:1 + H, :] = x_ref[...].astype(jnp.bfloat16)
    acc1 = jnp.zeros((Bt * H, WCmid), jnp.float32)
    for kh in range(3):
        win = xpad_ref[:, kh:kh + H, :].reshape(Bt * H, WCin)
        acc1 = acc1 + jnp.dot(win, w1_ref[kh],
                              preferred_element_type=jnp.float32)

    # ---- bn1 (folded, f32) + relu -> padded bf16 intermediate --------------
    out1 = jnp.maximum(acc1 * s1_ref[...] + b1_ref[...], 0.0)
    mid_ref[:, 1:1 + H, :] = out1.reshape(Bt, H, WCmid).astype(jnp.bfloat16)

    # ---- conv2: 3 accumulated matmuls over the kh taps, K = W*Cmid ---------
    acc2 = jnp.zeros((Bt * H, WCout), jnp.float32)
    for kh in range(3):
        win = mid_ref[:, kh:kh + H, :].reshape(Bt * H, WCmid)
        acc2 = acc2 + jnp.dot(win, w2_ref[kh],
                              preferred_element_type=jnp.float32)

    # ---- bn2 (folded) + identity shortcut + relu ---------------------------
    out2 = (acc2 * s2_ref[...] + b2_ref[...]).reshape(Bt, H, WCout)
    # Re-load x here (point of use) instead of holding it live across both
    # matmuls -> lower vreg pressure.
    out_ref[...] = jnp.maximum(out2 + x_ref[...], 0.0)


def make_banded_weights(w_hwio, W):
    """Fold the kw taps + SAME zero padding in W into block-banded matrices.

    w_hwio: (3, 3, Cin, Cout) f32.  Returns (3, W*Cin, W*Cout) bf16 where
    band[kh][wi*Cin+ci, wo*Cout+co] = w[kh, kw, ci, co] iff wi == wo + kw - 1.
    """
    kH, kW, _, _ = w_hwio.shape
    bands = []
    for kh in range(kH):
        b = sum(jnp.kron(jnp.eye(W, W, k=1 - kw, dtype=w_hwio.dtype),
                         w_hwio[kh, kw]) for kw in range(kW))
        bands.append(b)
    return jnp.stack(bands).astype(jnp.bfloat16)


def fold_bn(gamma, beta, mean, var, eps=1e-5):
    scale = gamma / jnp.sqrt(var + eps)
    bias = beta - mean * scale
    return scale[None, :], bias[None, :]


def basic_block_forward(x_nhwc, w1_hwio, bn1, w2_hwio, bn2, *, eps=1e-5,
                        block_batch=None):
    """x_nhwc: (N,H,W,Cin) f32.  w*_hwio: (3,3,Cin,Cout) f32.
    bn* = (gamma, beta, running_mean, running_var)."""
    N, H, W, Cin = x_nhwc.shape
    Cmid = w1_hwio.shape[3]
    Cout = w2_hwio.shape[3]
    assert w1_hwio.shape == (3, 3, Cin, Cmid)
    assert w2_hwio.shape == (3, 3, Cmid, Cout)
    # Identity shortcut only (stride==1, in_planes == planes).
    assert Cin == Cout, "projection shortcut not implemented"

    Bt = N if block_batch is None else block_batch
    assert N % Bt == 0

    # Banded conv weights (bf16) and folded BN affines (f32, tiled per w).
    w1b = make_banded_weights(w1_hwio, W)            # (3, W*Cin,  W*Cmid)
    w2b = make_banded_weights(w2_hwio, W)            # (3, W*Cmid, W*Cout)
    s1, b1 = fold_bn(*bn1, eps)
    s2, b2 = fold_bn(*bn2, eps)
    s1 = jnp.tile(s1, (1, W))
    b1 = jnp.tile(b1, (1, W))
    s2 = jnp.tile(s2, (1, W))
    b2 = jnp.tile(b2, (1, W))

    # Lane-dense presentation: (N, H, W*C).  Row-major reshape -> free.
    x_flat = x_nhwc.reshape(N, H, W * Cin)

    out = pl.pallas_call(
        basic_block_kernel,
        out_shape=jax.ShapeDtypeStruct((N, H, W * Cout), jnp.float32),
        grid_spec=pltpu.PrefetchScalarGridSpec(
            num_scalar_prefetch=0,
            grid=(N // Bt,),
            in_specs=[
                pl.BlockSpec((Bt, H, W * Cin), lambda b: (b, 0, 0)),
                pl.BlockSpec((3, W * Cin, W * Cmid), lambda b: (0, 0, 0)),
                pl.BlockSpec((1, W * Cmid), lambda b: (0, 0)),
                pl.BlockSpec((1, W * Cmid), lambda b: (0, 0)),
                pl.BlockSpec((3, W * Cmid, W * Cout), lambda b: (0, 0, 0)),
                pl.BlockSpec((1, W * Cout), lambda b: (0, 0)),
                pl.BlockSpec((1, W * Cout), lambda b: (0, 0)),
            ],
            out_specs=pl.BlockSpec((Bt, H, W * Cout), lambda b: (b, 0, 0)),
            scratch_shapes=[
                pltpu.VMEM((Bt, H + 2, W * Cin), jnp.bfloat16),   # padded x
                pltpu.VMEM((Bt, H + 2, W * Cmid), jnp.bfloat16),  # padded mid
            ],
        ),
        compiler_params=pltpu.CompilerParams(
            dimension_semantics=("parallel",),
            vmem_limit_bytes=48 * 1024 * 1024,   # stays under v7x's 64 MiB
        ),
    )(x_flat, w1b, s1, b1, w2b, s2, b2)

    return out.reshape(N, H, W, Cout)


def ref_forward(x_nhwc, w1_hwio, bn1, w2_hwio, bn2, eps=1e-5):
    g1, b1, m1, v1 = bn1
    g2, b2, m2, v2 = bn2
    dn = ("NHWC", "HWIO", "NHWC")
    y = lax.conv_general_dilated(x_nhwc, w1_hwio, (1, 1), "SAME",
                                 dimension_numbers=dn)
    y = (y - m1) / jnp.sqrt(v1 + eps) * g1 + b1
    y = jnp.maximum(y, 0.0)
    z = lax.conv_general_dilated(y, w2_hwio, (1, 1), "SAME",
                                 dimension_numbers=dn)
    z = (z - m2) / jnp.sqrt(v2 + eps) * g2 + b2
    return jnp.maximum(z + x_nhwc, 0.0)


if __name__ == "__main__":
    # BasicBlock(in_planes=4, planes=4, stride=1) -> identity shortcut.
    N, H, W = 2, 16, 16
    in_planes = planes = 4

    key = jax.random.PRNGKey(0)
    ks = jax.random.split(key, 11)

    # Input built directly in NHWC (PyTorch NCHW (2,4,16,16) transposed).
    x = jax.random.normal(ks[0], (N, H, W, in_planes), jnp.float32)

    # Conv weights in PyTorch layout (Cout, Cin, kH, kW) -> (kH, kW, Cin, Cout).
    w1_oihw = 0.2 * jax.random.normal(ks[1], (planes, in_planes, 3, 3), jnp.float32)
    w2_oihw = 0.2 * jax.random.normal(ks[2], (planes, planes, 3, 3), jnp.float32)
    w1_hwio = jnp.transpose(w1_oihw, (2, 3, 1, 0))
    w2_hwio = jnp.transpose(w2_oihw, (2, 3, 1, 0))

    # BatchNorm parameters / running stats (deterministic, non-trivial).
    g1 = 1.0 + 0.1 * jax.random.normal(ks[3], (planes,), jnp.float32)
    be1 = 0.1 * jax.random.normal(ks[4], (planes,), jnp.float32)
    m1 = 0.1 * jax.random.normal(ks[5], (planes,), jnp.float32)
    v1 = jnp.abs(jax.random.normal(ks[6], (planes,), jnp.float32)) + 0.5
    g2 = 1.0 + 0.1 * jax.random.normal(ks[7], (planes,), jnp.float32)
    be2 = 0.1 * jax.random.normal(ks[8], (planes,), jnp.float32)
    m2 = 0.1 * jax.random.normal(ks[9], (planes,), jnp.float32)
    v2 = jnp.abs(jax.random.normal(ks[10], (planes,), jnp.float32)) + 0.5

    out = basic_block_forward(x, w1_hwio, (g1, be1, m1, v1),
                              w2_hwio, (g2, be2, m2, v2))
    out = jax.block_until_ready(out)

    ref = ref_forward(x, w1_hwio, (g1, be1, m1, v1), w2_hwio, (g2, be2, m2, v2))
    assert out.shape == (N, H, W, planes)
    # bf16 matmul operands (f32 accumulation) -> loosened tolerance vs f32 ref.
    assert jnp.allclose(out, ref, atol=5e-2, rtol=5e-2), \
        f"max abs err {jnp.max(jnp.abs(out - ref))}"

    print("KERNEL_OK")
</pallas_src>

<mosaic_0001>
module attributes {stable_mosaic.version = 11 : i64} {
  func.func @basic_block_kernel(%arg0: i32, %arg1: memref<2x16x64xf32, #tpu.memory_space<vmem>>, %arg2: memref<3x64x64xbf16, #tpu.memory_space<vmem>>, %arg3: memref<1x64xf32, #tpu.memory_space<vmem>>, %arg4: memref<1x64xf32, #tpu.memory_space<vmem>>, %arg5: memref<3x64x64xbf16, #tpu.memory_space<vmem>>, %arg6: memref<1x64xf32, #tpu.memory_space<vmem>>, %arg7: memref<1x64xf32, #tpu.memory_space<vmem>>, %arg8: memref<2x16x64xf32, #tpu.memory_space<vmem>>, %arg9: memref<2x18x64xbf16, #tpu.memory_space<vmem>>, %arg10: memref<2x18x64xbf16, #tpu.memory_space<vmem>>) attributes {dimension_semantics = [#tpu.dimension_semantics<parallel>], iteration_bounds = array<i64: 1>, scalar_prefetch = 0 : i64, scratch_operands = 2 : i64, tpu.core_type = #tpu.core_type<tc>, window_params = [{transform_indices = @transform_0, window_bounds = array<i64: 2, 16, 64>}, {pipeline_mode = #tpu.pipeline_mode<synchronous>, transform_indices = @transform_1, window_bounds = array<i64: 3, 64, 64>}, {pipeline_mode = #tpu.pipeline_mode<synchronous>, transform_indices = @transform_2, window_bounds = array<i64: 1, 64>}, {pipeline_mode = #tpu.pipeline_mode<synchronous>, transform_indices = @transform_3, window_bounds = array<i64: 1, 64>}, {pipeline_mode = #tpu.pipeline_mode<synchronous>, transform_indices = @transform_4, window_bounds = array<i64: 3, 64, 64>}, {pipeline_mode = #tpu.pipeline_mode<synchronous>, transform_indices = @transform_5, window_bounds = array<i64: 1, 64>}, {pipeline_mode = #tpu.pipeline_mode<synchronous>, transform_indices = @transform_6, window_bounds = array<i64: 1, 64>}, {transform_indices = @transform_7, window_bounds = array<i64: 2, 16, 64>}]} {
    %cst = arith.constant 0.000000e+00 : bf16
    %0 = vector.broadcast %cst : bf16 to vector<2x1x64xbf16>
    %c0 = arith.constant 0 : index
    %c0_0 = arith.constant 0 : index
    %c0_1 = arith.constant 0 : index
    %1 = vector.load %arg9[%c0, %c0_0, %c0_1] : memref<2x18x64xbf16, #tpu.memory_space<vmem>>, vector<2x1x64xbf16>
    tpu.vector_store %arg9[%c0, %c0_0, %c0_1], %0 {strides = array<i32>} : memref<2x18x64xbf16, #tpu.memory_space<vmem>>, vector<2x1x64xbf16>,
    %cst_2 = arith.constant 0.000000e+00 : bf16
    %2 = vector.broadcast %cst_2 : bf16 to vector<2x1x64xbf16>
    %c0_3 = arith.constant 0 : index
    %c17 = arith.constant 17 : index
    %c0_4 = arith.constant 0 : index
    %3 = vector.load %arg9[%c0_3, %c17, %c0_4] : memref<2x18x64xbf16, #tpu.memory_space<vmem>>, vector<2x1x64xbf16>
    tpu.vector_store %arg9[%c0_3, %c17, %c0_4], %2 {strides = array<i32>} : memref<2x18x64xbf16, #tpu.memory_space<vmem>>, vector<2x1x64xbf16>,
    %cst_5 = arith.constant 0.000000e+00 : bf16
    %4 = vector.broadcast %cst_5 : bf16 to vector<2x1x64xbf16>
    %c0_6 = arith.constant 0 : index
    %c0_7 = arith.constant 0 : index
    %c0_8 = arith.constant 0 : index
    %5 = vector.load %arg10[%c0_6, %c0_7, %c0_8] : memref<2x18x64xbf16, #tpu.memory_space<vmem>>, vector<2x1x64xbf16>
    tpu.vector_store %arg10[%c0_6, %c0_7, %c0_8], %4 {strides = array<i32>} : memref<2x18x64xbf16, #tpu.memory_space<vmem>>, vector<2x1x64xbf16>,
    %cst_9 = arith.constant 0.000000e+00 : bf16
    %6 = vector.broadcast %cst_9 : bf16 to vector<2x1x64xbf16>
    %c0_10 = arith.constant 0 : index
    %c17_11 = arith.constant 17 : index
    %c0_12 = arith.constant 0 : index
    %7 = vector.load %arg10[%c0_10, %c17_11, %c0_12] : memref<2x18x64xbf16, #tpu.memory_space<vmem>>, vector<2x1x64xbf16>
    tpu.vector_store %arg10[%c0_10, %c17_11, %c0_12], %6 {strides = array<i32>} : memref<2x18x64xbf16, #tpu.memory_space<vmem>>, vector<2x1x64xbf16>,
    %c0_13 = arith.constant 0 : index
    %c0_14 = arith.constant 0 : index
    %c0_15 = arith.constant 0 : index
    %8 = vector.load %arg1[%c0_13, %c0_14, %c0_15] : memref<2x16x64xf32, #tpu.memory_space<vmem>>, vector<2x16x64xf32>
    %9 = arith.truncf %8 : vector<2x16x64xf32> to vector<2x16x64xbf16>
    %c0_16 = arith.constant 0 : index
    %c1 = arith.constant 1 : index
    %c0_17 = arith.constant 0 : index
    %10 = vector.load %arg9[%c0_16, %c1, %c0_17] : memref<2x18x64xbf16, #tpu.memory_space<vmem>>, vector<2x16x64xbf16>
    tpu.vector_store %arg9[%c0_16, %c1, %c0_17], %9 {strides = array<i32>} : memref<2x18x64xbf16, #tpu.memory_space<vmem>>, vector<2x16x64xbf16>,
    %cst_18 = arith.constant 0.000000e+00 : f32
    %11 = vector.broadcast %cst_18 : f32 to vector<32x64xf32>
    %c0_19 = arith.constant 0 : index
    %c0_20 = arith.constant 0 : index
    %c0_21 = arith.constant 0 : index
    %12 = vector.load %arg9[%c0_19, %c0_20, %c0_21] : memref<2x18x64xbf16, #tpu.memory_space<vmem>>, vector<2x16x64xbf16>
    %13 = vector.shape_cast %12 : vector<2x16x64xbf16> to vector<32x64xbf16>
    %c0_22 = arith.constant 0 : index
    %c0_23 = arith.constant 0 : index
    %c0_24 = arith.constant 0 : index
    %14 = vector.load %arg2[%c0_22, %c0_23, %c0_24] : memref<3x64x64xbf16, #tpu.memory_space<vmem>>, vector<1x64x64xbf16>
    %15 = vector.shape_cast %14 : vector<1x64x64xbf16> to vector<64x64xbf16>
    %cst_25 = arith.constant dense<0.000000e+00> : vector<32x64xf32>
    %16 = tpu.matmul %13, %15, %cst_25 {dimension_numbers = #tpu.dot_dimension_numbers<[1], [0], [0], [1], [0, 0, 1, 1], [], []>} : vector<32x64xbf16>, vector<64x64xbf16>, vector<32x64xf32> -> vector<32x64xf32>
    %17 = arith.addf %11, %16 : vector<32x64xf32>
    %c0_26 = arith.constant 0 : index
    %c1_27 = arith.constant 1 : index
    %c0_28 = arith.constant 0 : index
    %18 = vector.load %arg9[%c0_26, %c1_27, %c0_28] : memref<2x18x64xbf16, #tpu.memory_space<vmem>>, vector<2x16x64xbf16>
    %19 = vector.shape_cast %18 : vector<2x16x64xbf16> to vector<32x64xbf16>
    %c1_29 = arith.constant 1 : index
    %c0_30 = arith.constant 0 : index
    %c0_31 = arith.constant 0 : index
    %20 = vector.load %arg2[%c1_29, %c0_30, %c0_31] : memref<3x64x64xbf16, #tpu.memory_space<vmem>>, vector<1x64x64xbf16>
    %21 = vector.shape_cast %20 : vector<1x64x64xbf16> to vector<64x64xbf16>
    %cst_32 = arith.constant dense<0.000000e+00> : vector<32x64xf32>
    %22 = tpu.matmul %19, %21, %cst_32 {dimension_numbers = #tpu.dot_dimension_numbers<[1], [0], [0], [1], [0, 0, 1, 1], [], []>} : vector<32x64xbf16>, vector<64x64xbf16>, vector<32x64xf32> -> vector<32x64xf32>
    %23 = arith.addf %17, %22 : vector<32x64xf32>
    %c0_33 = arith.constant 0 : index
    %c2 = arith.constant 2 : index
    %c0_34 = arith.constant 0 : index
    %24 = vector.load %arg9[%c0_33, %c2, %c0_34] : memref<2x18x64xbf16, #tpu.memory_space<vmem>>, vector<2x16x64xbf16>
    %25 = vector.shape_cast %24 : vector<2x16x64xbf16> to vector<32x64xbf16>
    %c2_35 = arith.constant 2 : index
    %c0_36 = arith.constant 0 : index
    %c0_37 = arith.constant 0 : index
    %26 = vector.load %arg2[%c2_35, %c0_36, %c0_37] : memref<3x64x64xbf16, #tpu.memory_space<vmem>>, vector<1x64x64xbf16>
    %27 = vector.shape_cast %26 : vector<1x64x64xbf16> to vector<64x64xbf16>
    %cst_38 = arith.constant dense<0.000000e+00> : vector<32x64xf32>
    %28 = tpu.matmul %25, %27, %cst_38 {dimension_numbers = #tpu.dot_dimension_numbers<[1], [0], [0], [1], [0, 0, 1, 1], [], []>} : vector<32x64xbf16>, vector<64x64xbf16>, vector<32x64xf32> -> vector<32x64xf32>
    %29 = arith.addf %23, %28 : vector<32x64xf32>
    %c0_39 = arith.constant 0 : index
    %c0_40 = arith.constant 0 : index
    %30 = vector.load %arg3[%c0_39, %c0_40] : memref<1x64xf32, #tpu.memory_space<vmem>>, vector<1x64xf32>
    %31 = vector.broadcast %30 : vector<1x64xf32> to vector<32x64xf32>
    %32 = arith.mulf %29, %31 : vector<32x64xf32>
    %c0_41 = arith.constant 0 : index
    %c0_42 = arith.constant 0 : index
    %33 = vector.load %arg4[%c0_41, %c0_42] : memref<1x64xf32, #tpu.memory_space<vmem>>, vector<1x64xf32>
    %34 = vector.broadcast %33 : vector<1x64xf32> to vector<32x64xf32>
    %35 = arith.addf %32, %34 : vector<32x64xf32>
    %cst_43 = arith.constant 0.000000e+00 : f32
    %36 = vector.broadcast %cst_43 : f32 to vector<32x64xf32>
    %37 = arith.maximumf %35, %36 : vector<32x64xf32>
    %38 = vector.shape_cast %37 : vector<32x64xf32> to vector<2x16x64xf32>
    %39 = arith.truncf %38 : vector<2x16x64xf32> to vector<2x16x64xbf16>
    %c0_44 = arith.constant 0 : index
    %c1_45 = arith.constant 1 : index
    %c0_46 = arith.constant 0 : index
    %40 = vector.load %arg10[%c0_44, %c1_45, %c0_46] : memref<2x18x64xbf16, #tpu.memory_space<vmem>>, vector<2x16x64xbf16>
    tpu.vector_store %arg10[%c0_44, %c1_45, %c0_46], %39 {strides = array<i32>} : memref<2x18x64xbf16, #tpu.memory_space<vmem>>, vector<2x16x64xbf16>,
    %cst_47 = arith.constant 0.000000e+00 : f32
    %41 = vector.broadcast %cst_47 : f32 to vector<32x64xf32>
    %c0_48 = arith.constant 0 : index
    %c0_49 = arith.constant 0 : index
    %c0_50 = arith.constant 0 : index
    %42 = vector.load %arg10[%c0_48, %c0_49, %c0_50] : memref<2x18x64xbf16, #tpu.memory_space<vmem>>, vector<2x16x64xbf16>
    %43 = vector.shape_cast %42 : vector<2x16x64xbf16> to vector<32x64xbf16>
    %c0_51 = arith.constant 0 : index
    %c0_52 = arith.constant 0 : index
    %c0_53 = arith.constant 0 : index
    %44 = vector.load %arg5[%c0_51, %c0_52, %c0_53] : memref<3x64x64xbf16, #tpu.memory_space<vmem>>, vector<1x64x64xbf16>
    %45 = vector.shape_cast %44 : vector<1x64x64xbf16> to vector<64x64xbf16>
    %cst_54 = arith.constant dense<0.000000e+00> : vector<32x64xf32>
    %46 = tpu.matmul %43, %45, %cst_54 {dimension_numbers = #tpu.dot_dimension_numbers<[1], [0], [0], [1], [0, 0, 1, 1], [], []>} : vector<32x64xbf16>, vector<64x64xbf16>, vector<32x64xf32> -> vector<32x64xf32>
    %47 = arith.addf %41, %46 : vector<32x64xf32>
    %c0_55 = arith.constant 0 : index
    %c1_56 = arith.constant 1 : index
    %c0_57 = arith.constant 0 : index
    %48 = vector.load %arg10[%c0_55, %c1_56, %c0_57] : memref<2x18x64xbf16, #tpu.memory_space<vmem>>, vector<2x16x64xbf16>
    %49 = vector.shape_cast %48 : vector<2x16x64xbf16> to vector<32x64xbf16>
    %c1_58 = arith.constant 1 : index
    %c0_59 = arith.constant 0 : index
    %c0_60 = arith.constant 0 : index
    %50 = vector.load %arg5[%c1_58, %c0_59, %c0_60] : memref<3x64x64xbf16, #tpu.memory_space<vmem>>, vector<1x64x64xbf16>
    %51 = vector.shape_cast %50 : vector<1x64x64xbf16> to vector<64x64xbf16>
    %cst_61 = arith.constant dense<0.000000e+00> : vector<32x64xf32>
    %52 = tpu.matmul %49, %51, %cst_61 {dimension_numbers = #tpu.dot_dimension_numbers<[1], [0], [0], [1], [0, 0, 1, 1], [], []>} : vector<32x64xbf16>, vector<64x64xbf16>, vector<32x64xf32> -> vector<32x64xf32>
    %53 = arith.addf %47, %52 : vector<32x64xf32>
    %c0_62 = arith.constant 0 : index
    %c2_63 = arith.constant 2 : index
    %c0_64 = arith.constant 0 : index
    %54 = vector.load %arg10[%c0_62, %c2_63, %c0_64] : memref<2x18x64xbf16, #tpu.memory_space<vmem>>, vector<2x16x64xbf16>
    %55 = vector.shape_cast %54 : vector<2x16x64xbf16> to vector<32x64xbf16>
    %c2_65 = arith.constant 2 : index
    %c0_66 = arith.constant 0 : index
    %c0_67 = arith.constant 0 : index
    %56 = vector.load %arg5[%c2_65, %c0_66, %c0_67] : memref<3x64x64xbf16, #tpu.memory_space<vmem>>, vector<1x64x64xbf16>
    %57 = vector.shape_cast %56 : vector<1x64x64xbf16> to vector<64x64xbf16>
    %cst_68 = arith.constant dense<0.000000e+00> : vector<32x64xf32>
    %58 = tpu.matmul %55, %57, %cst_68 {dimension_numbers = #tpu.dot_dimension_numbers<[1], [0], [0], [1], [0, 0, 1, 1], [], []>} : vector<32x64xbf16>, vector<64x64xbf16>, vector<32x64xf32> -> vector<32x64xf32>
    %59 = arith.addf %53, %58 : vector<32x64xf32>
    %c0_69 = arith.constant 0 : index
    %c0_70 = arith.constant 0 : index
    %60 = vector.load %arg6[%c0_69, %c0_70] : memref<1x64xf32, #tpu.memory_space<vmem>>, vector<1x64xf32>
    %61 = vector.broadcast %60 : vector<1x64xf32> to vector<32x64xf32>
    %62 = arith.mulf %59, %61 : vector<32x64xf32>
    %c0_71 = arith.constant 0 : index
    %c0_72 = arith.constant 0 : index
    %63 = vector.load %arg7[%c0_71, %c0_72] : memref<1x64xf32, #tpu.memory_space<vmem>>, vector<1x64xf32>
    %64 = vector.broadcast %63 : vector<1x64xf32> to vector<32x64xf32>
    %65 = arith.addf %62, %64 : vector<32x64xf32>
    %66 = vector.shape_cast %65 : vector<32x64xf32> to vector<2x16x64xf32>
    %c0_73 = arith.constant 0 : index
    %c0_74 = arith.constant 0 : index
    %c0_75 = arith.constant 0 : index
    %67 = vector.load %arg1[%c0_73, %c0_74, %c0_75] : memref<2x16x64xf32, #tpu.memory_space<vmem>>, vector<2x16x64xf32>
    %68 = arith.addf %66, %67 : vector<2x16x64xf32>
    %cst_76 = arith.constant 0.000000e+00 : f32
    %69 = vector.broadcast %cst_76 : f32 to vector<2x16x64xf32>
    %70 = arith.maximumf %68, %69 : vector<2x16x64xf32>
    %c0_77 = arith.constant 0 : index
    %c0_78 = arith.constant 0 : index
    %c0_79 = arith.constant 0 : index
    %71 = vector.load %arg8[%c0_77, %c0_78, %c0_79] : memref<2x16x64xf32, #tpu.memory_space<vmem>>, vector<2x16x64xf32>
    tpu.vector_store %arg8[%c0_77, %c0_78, %c0_79], %70 {strides = array<i32>} : memref<2x16x64xf32, #tpu.memory_space<vmem>>, vector<2x16x64xf32>,
    return
  }
  func.func @transform_0(%arg0: i32) -> (i32, i32, i32) {
    %c0_i32 = arith.constant 0 : i32
    %c0_i32_0 = arith.constant 0 : i32
    %c0_i32_1 = arith.constant 0 : i32
    return %arg0, %c0_i32, %c0_i32_0 : i32, i32, i32
  }
  func.func @transform_1(%arg0: i32) -> (i32, i32, i32) {
    %c0_i32 = arith.constant 0 : i32
    %c0_i32_0 = arith.constant 0 : i32
    %c0_i32_1 = arith.constant 0 : i32
    %c0_i32_2 = arith.constant 0 : i32
    return %c0_i32, %c0_i32_0, %c0_i32_1 : i32, i32, i32
  }
  func.func @transform_2(%arg0: i32) -> (i32, i32) {
    %c0_i32 = arith.constant 0 : i32
    %c0_i32_0 = arith.constant 0 : i32
    %c0_i32_1 = arith.constant 0 : i32
    return %c0_i32, %c0_i32_0 : i32, i32
  }
  func.func @transform_3(%arg0: i32) -> (i32, i32) {
    %c0_i32 = arith.constant 0 : i32
    %c0_i32_0 = arith.constant 0 : i32
    %c0_i32_1 = arith.constant 0 : i32
    return %c0_i32, %c0_i32_0 : i32, i32
  }
  func.func @transform_4(%arg0: i32) -> (i32, i32, i32) {
    %c0_i32 = arith.constant 0 : i32
    %c0_i32_0 = arith.constant 0 : i32
    %c0_i32_1 = arith.constant 0 : i32
    %c0_i32_2 = arith.constant 0 : i32
    return %c0_i32, %c0_i32_0, %c0_i32_1 : i32, i32, i32
  }
  func.func @transform_5(%arg0: i32) -> (i32, i32) {
    %c0_i32 = arith.constant 0 : i32
    %c0_i32_0 = arith.constant 0 : i32
    %c0_i32_1 = arith.constant 0 : i32
    return %c0_i32, %c0_i32_0 : i32, i32
  }
  func.func @transform_6(%arg0: i32) -> (i32, i32) {
    %c0_i32 = arith.constant 0 : i32
    %c0_i32_0 = arith.constant 0 : i32
    %c0_i32_1 = arith.constant 0 : i32
    return %c0_i32, %c0_i32_0 : i32, i32
  }
  func.func @transform_7(%arg0: i32) -> (i32, i32, i32) {
    %c0_i32 = arith.constant 0 : i32
    %c0_i32_0 = arith.constant 0 : i32
    %c0_i32_1 = arith.constant 0 : i32
    return %arg0, %c0_i32, %c0_i32_0 : i32, i32, i32
  }
}

</mosaic_0001>

<llo_original>
// kernel: tpu_custom_call.1
$region0: #{tpu_custom_call.1}
  #allocation0 [shape = 'u32[]', space=smem, size = 0x4, offset = 0x4, fixed_abs, tag = 'smem constant byte address 0x4 - core index']
  #allocation1 [shape = 'u32[144,128]{1,0:T(1,128)}', space=vmem, size = 0x12000, scoped, tag = 'internal scratch']
  #allocation2 [shape = 'bf16[2,18,64]{2,1,0:T(8,128)(2,1)}', space=vmem, size = 0x3000, scoped, tag = 'scratch operand']
  #allocation3 [shape = 'bf16[2,18,64]{2,1,0:T(8,128)(2,1)}', space=vmem, size = 0x3000, scoped, tag = 'scratch operand']
  %s0 = inlined_call_operand.hbm [shape: f32[2,16,64], index: 0, kind: input, shape index: {}]
  %s1 = inlined_call_operand.hbm [shape: bf16[3,64,64], index: 1, kind: input, shape index: {}]
  %s2 = inlined_call_operand.vmem [shape: f32[1,64], index: 2, kind: input, shape index: {}]
  %s3 = inlined_call_operand.vmem [shape: f32[1,64], index: 3, kind: input, shape index: {}]
  %s4 = inlined_call_operand.hbm [shape: bf16[3,64,64], index: 4, kind: input, shape index: {}]
  %s5 = inlined_call_operand.vmem [shape: f32[1,64], index: 5, kind: input, shape index: {}]
  %s6 = inlined_call_operand.vmem [shape: f32[1,64], index: 6, kind: input, shape index: {}]
  %s7 = inlined_call_operand.hbm [shape: f32[2,16,64], index: 7, kind: output, shape index: {}]
  %s8 = sld [smem:[#allocation0]]
  $region50: #{tpu_custom_call.1} parent=0
    _
  %s10 = ssub.s32 1, %s8
  %s11 = scalar_select 0, %s10, %s8
  $region1: #{tpu_custom_call.1} parent=0
    #allocation4 [shape = 'u8[16384]{0}', space=vmem, size = 0x4000, scoped, tag = 'input window, operand 0, single buffered']
    #allocation5 [shape = 's32[1]{0}', space=sflag, size = 0x4, scoped, tag = 'scoped memory for tpu_custom_call.1']
    #allocation6 [shape = 's32[1]{0}', space=sflag, size = 0x4, scoped, tag = 'scoped memory for tpu_custom_call.1']
    #allocation7 [shape = 'u8[49152]{0}', space=vmem, size = 0xc000, scoped, tag = 'input window, operand 1, single buffered']
    #allocation8 [shape = 's32[1]{0}', space=sflag, size = 0x4, scoped, tag = 'scoped memory for tpu_custom_call.1']
    #allocation9 [shape = 'u8[49152]{0}', space=vmem, size = 0xc000, scoped, tag = 'input window, operand 4, single buffered']
    #allocation10 [shape = 'u8[16384]{0}', space=vmem, size = 0x4000, scoped, tag = 'output window, operand 0, single buffered']
    %12 = vsyncpa [#allocation5], 0
    %13 = vsyncpa [#allocation8], 0
    %14 = vsyncpa [#allocation6], 0
    // Predicated region
    $region2: #{tpu_custom_call.1} parent=1 // pred_check
      _
    $region3: #{tpu_custom_call.1} parent=1 // pred_check_branch
      %16 = sbr.rel (0) target = $region5
    $region4: #{tpu_custom_call.1} parent=1 // pred_region
      %s18 = ssub.s32 512, 512
      %19 = vsyncadd [#allocation5], %s18
      %s20 = sshll.u32 [#allocation4], 4
      %s21 = int_to_ptr.vmem [resolvable:$true] %s20
      %26 = dma.hbm_to_vmem [thread:$0]  %s0, 512, %s21, [#allocation5], 128, 128, 8
    $region5: #{tpu_custom_call.1} parent=1 // pred_fallthru
      _
    // Predicated region
    $region6: #{tpu_custom_call.1} parent=1 // pred_check
      _
    $region7: #{tpu_custom_call.1} parent=1 // pred_check_branch
      %28 = sbr.rel (0) target = $region9
    $region8: #{tpu_custom_call.1} parent=1 // pred_region
      %s30 = ssub.s32 1536, 1536
      %31 = vsyncadd [#allocation8], %s30
      %s32 = sshll.u32 [#allocation7], 4
      %s33 = int_to_ptr.vmem [resolvable:$true] %s32
      %38 = dma.hbm_to_vmem [thread:$0]  %s1, 1536, %s33, [#allocation8], 64, 64, 4
    $region9: #{tpu_custom_call.1} parent=1 // pred_fallthru
      _
    // Predicated region
    $region10: #{tpu_custom_call.1} parent=1 // pred_check
      _
    $region11: #{tpu_custom_call.1} parent=1 // pred_check_branch
      %40 = sbr.rel (0) target = $region13
    $region12: #{tpu_custom_call.1} parent=1 // pred_region
      _
    $region13: #{tpu_custom_call.1} parent=1 // pred_fallthru
      _
    // Predicated region
    $region14: #{tpu_custom_call.1} parent=1 // pred_check
      _
    $region15: #{tpu_custom_call.1} parent=1 // pred_check_branch
      %42 = sbr.rel (0) target = $region17
    $region16: #{tpu_custom_call.1} parent=1 // pred_region
      _
    $region17: #{tpu_custom_call.1} parent=1 // pred_fallthru
      _
    // Predicated region
    $region18: #{tpu_custom_call.1} parent=1 // pred_check
      _
    $region19: #{tpu_custom_call.1} parent=1 // pred_check_branch
      %44 = sbr.rel (0) target = $region21
    $region20: #{tpu_custom_call.1} parent=1 // pred_region
      %s46 = ssub.s32 1536, 1536
      %47 = vsyncadd [#allocation8], %s46
      %s48 = sshll.u32 [#allocation9], 4
      %s49 = int_to_ptr.vmem [resolvable:$true] %s48
      %54 = dma.hbm_to_vmem [thread:$0]  %s4, 1536, %s49, [#allocation8], 64, 64, 4
    $region21: #{tpu_custom_call.1} parent=1 // pred_fallthru
      _
    // Predicated region
    $region22: #{tpu_custom_call.1} parent=1 // pred_check
      _
    $region23: #{tpu_custom_call.1} parent=1 // pred_check_branch
      %56 = sbr.rel (0) target = $region25
    $region24: #{tpu_custom_call.1} parent=1 // pred_region
      _
    $region25: #{tpu_custom_call.1} parent=1 // pred_fallthru
      _
    // Predicated region
    $region26: #{tpu_custom_call.1} parent=1 // pred_check
      _
    $region27: #{tpu_custom_call.1} parent=1 // pred_check_branch
      %58 = sbr.rel (0) target = $region29
    $region28: #{tpu_custom_call.1} parent=1 // pred_region
      _
    $region29: #{tpu_custom_call.1} parent=1 // pred_fallthru
      _
    // Predicated region
    $region30: #{tpu_custom_call.1} parent=1 // pred_check
      _
    $region31: #{tpu_custom_call.1} parent=1 // pred_check_branch
      %60 = sbr.rel (0) target = $region33
    $region32: #{tpu_custom_call.1} parent=1 // pred_region
      %61 = dma.done [#allocation5], 512
    $region33: #{tpu_custom_call.1} parent=1 // pred_fallthru
      _
    // Predicated region
    $region34: #{tpu_custom_call.1} parent=1 // pred_check
      _
    $region35: #{tpu_custom_call.1} parent=1 // pred_check_branch
      %63 = sbr.rel (0) target = $region37
    $region36: #{tpu_custom_call.1} parent=1 // pred_region
      %64 = dma.done [#allocation8], 1536
    $region37: #{tpu_custom_call.1} parent=1 // pred_fallthru
      _
    // Predicated region
    $region38: #{tpu_custom_call.1} parent=1 // pred_check
      _
    $region39: #{tpu_custom_call.1} parent=1 // pred_check_branch
      %66 = sbr.rel (0) target = $region41
    $region40: #{tpu_custom_call.1} parent=1 // pred_region
      %67 = dma.done [#allocation8], 1536
    $region41: #{tpu_custom_call.1} parent=1 // pred_fallthru
      _
    %vm69 = vcmask 516096
    %vm70 = vsmask.f32 256
    %vm71 = vmand %vm69, %vm70
    %v72 = vld [vmem:[#allocation2] sm:$0x1]
    %v73 = vsel %vm71, 0, %v72
    %74 = vst [vmem:[#allocation2] sm:$0x1] %v73
    %v75 = vld [vmem:[#allocation2 + $0xc] sm:$0x1]
    %v76 = vsel %vm71, 0, %v75
    %77 = vst [vmem:[#allocation2 + $0xc] sm:$0x1] %v76
    %vm78 = vsmask.f32 7938
    %vm79 = vmand %vm69, %vm78
    %v80 = vld [vmem:[#allocation2 + $0x8] sm:$0x1]
    %v81 = vsel %vm79, 0, %v80
    %82 = vst [vmem:[#allocation2 + $0x8] sm:$0x1] %v81
    %v83 = vld [vmem:[#allocation2 + $0x14] sm:$0x1]
    %v84 = vsel %vm79, 0, %v83
    %85 = vst [vmem:[#allocation2 + $0x14] sm:$0x1] %v84
    %v86 = vld [vmem:[#allocation3] sm:$0x1]
    %v87 = vsel %vm71, 0, %v86
    %88 = vst [vmem:[#allocation3] sm:$0x1] %v87
    %v89 = vld [vmem:[#allocation3 + $0xc] sm:$0x1]
    %v90 = vsel %vm71, 0, %v89
    %91 = vst [vmem:[#allocation3 + $0xc] sm:$0x1] %v90
    %v92 = vld [vmem:[#allocation3 + $0x8] sm:$0x1]
    %v93 = vsel %vm79, 0, %v92
    %94 = vst [vmem:[#allocation3 + $0x8] sm:$0x1] %v93
    %v95 = vld [vmem:[#allocation3 + $0x14] sm:$0x1]
    %v96 = vsel %vm79, 0, %v95
    %97 = vst [vmem:[#allocation3 + $0x14] sm:$0x1] %v96
    %v98 = vld [vmem:[#allocation4] sm:$0xff]
    %v99 = vld [vmem:[#allocation4 + $0x8] sm:$0xff]
    %v100 = vld [vmem:[#allocation4 + $0x10] sm:$0xff]
    %v101 = vld [vmem:[#allocation4 + $0x18] sm:$0xff]
    %v102 = vpack.c.bf16 %v99, %v98
    %v103 = vpack.c.bf16 %v101, %v100
    %v106 = vunpack.c.l.b16 %v102
    %v107 = vunpack.c.h.b16 %v102
    %v108 = vunpack.c.l.b16 %v103
    %v109 = vunpack.c.h.b16 %v103
    %v110 = vpack.c.b16 %v106, %v106
    %v111 = vpack.c.b16 %v107, %v107
    %v112 = vpack.c.b16 %v108, %v108
    %v113 = vpack.c.b16 %v109, %v109
    %vm114 = vsmask.f32 4368
    %vm115 = vmor %vm70, %vm114
    %v117 = vshrl.u32 %v110, 16
    %v119 = vrot.slane %v117, 7
    %v120 = vshll.u32 %v110, 16
    %v122 = vor.u32 %v119, %v120
    %v123 = vrot.slane %v119, 4
    %v125 = vshrl.u32 %v111, 16
    %v127 = vrot.slane %v125, 7
    %v128 = vshll.u32 %v111, 16
    %v130 = vor.u32 %v127, %v128
    %v131 = vsel %vm115, %v123, %v130
    %v132 = vrot.slane %v127, 4
    %v134 = vshrl.u32 %v112, 16
    %v136 = vrot.slane %v134, 7
    %v137 = vshll.u32 %v112, 16
    %v139 = vor.u32 %v136, %v137
    %v140 = vrot.slane %v136, 4
    %v142 = vshrl.u32 %v113, 16
    %v144 = vrot.slane %v142, 7
    %v145 = vshll.u32 %v113, 16
    %v147 = vor.u32 %v144, %v145
    %v148 = vsel %vm115, %v140, %v147
    %v149 = vrot.slane %v144, 4
    %vm156 = vcmask 519168
    %vm157 = vmand %vm156, %vm78
    %v158 = vld [vmem:[#allocation2] sm:$0xf]
    %v159 = vsel %vm157, %v122, %v158
    %160 = vst [vmem:[#allocation2] sm:$0xf] %v159
    %vm161 = vcmask 519168
    %162 = vst.msk [vmem:[#allocation2 + $0x4] sm:$0xf] %vm161, %v131
    %v163 = vld [vmem:[#allocation2 + $0x8] sm:$0x1]
    %v164 = vsel %vm71, %v132, %v163
    %165 = vst [vmem:[#allocation2 + $0x8] sm:$0x1] %v164
    %v166 = vld [vmem:[#allocation2 + $0xc] sm:$0xf]
    %v167 = vsel %vm157, %v139, %v166
    %168 = vst [vmem:[#allocation2 + $0xc] sm:$0xf] %v167
    %169 = vst.msk [vmem:[#allocation2 + $0x10] sm:$0xf] %vm161, %v148
    %v170 = vld [vmem:[#allocation2 + $0x14] sm:$0x1]
    %v171 = vsel %vm71, %v149, %v170
    %172 = vst [vmem:[#allocation2 + $0x14] sm:$0x1] %v171
    %v173 = vld [vmem:[#allocation2] sm:$0xf]
    %v174 = vld [vmem:[#allocation2 + $0x4] sm:$0xf]
    %v175 = vld [vmem:[#allocation2 + $0xc] sm:$0xf]
    %v176 = vld [vmem:[#allocation2 + $0x10] sm:$0xf]
    %v177 = vld [vmem:[#allocation7] sm:$0xf]
    %v178 = vld [vmem:[#allocation7 + $0x4] sm:$0xf]
    %v179 = vld [vmem:[#allocation7 + $0x8] sm:$0xf]
    %v180 = vld [vmem:[#allocation7 + $0xc] sm:$0xf]
    %v181 = vld [vmem:[#allocation7 + $0x10] sm:$0xf]
    %v182 = vld [vmem:[#allocation7 + $0x14] sm:$0xf]
    %v183 = vld [vmem:[#allocation7 + $0x18] sm:$0xf]
    %v184 = vld [vmem:[#allocation7 + $0x1c] sm:$0xf]
    %v185 = vld [vmem:[#allocation2 + $0x8] sm:$0x1]
    %v186 = vld [vmem:[#allocation2 + $0x14] sm:$0x1]
    %vm187 = vsmask.f32 3328
    %vm188 = vsmask.f32 7440
    %vm189 = vmor %vm187, %vm188
    %v191 = vshrl.u32 %v173, 16
    %v193 = vrot.slane %v191, 4
    %v194 = vshll.u32 %v173, 16
    %v196 = vrot.slane %v194, 5
    %v197 = vor.u32 %v193, %v196
    %v198 = vrot.slane %v197, 4
    %v200 = vshll.u32 %v174, 16
    %v202 = vrot.slane %v200, 5
    %v203 = vsel %vm189, %v198, %v202
    %v204 = vshrl.u32 %v174, 16
    %v206 = vrot.slane %v204, 4
    %v207 = vor.u32 %v206, %v202
    %v208 = vrot.slane %v207, 4
    %v210 = vshll.u32 %v185, 16
    %v212 = vrot.slane %v210, 5
    %v213 = vsel %vm189, %v208, %v212
    %v215 = vshrl.u32 %v175, 16
    %v217 = vrot.slane %v215, 4
    %v218 = vshll.u32 %v175, 16
    %v220 = vrot.slane %v218, 5
    %v221 = vor.u32 %v217, %v220
    %v222 = vrot.slane %v221, 4
    %v224 = vshll.u32 %v176, 16
    %v226 = vrot.slane %v224, 5
    %v227 = vsel %vm189, %v222, %v226
    %v228 = vshrl.u32 %v176, 16
    %v230 = vrot.slane %v228, 4
    %v231 = vor.u32 %v230, %v226
    %v232 = vrot.slane %v231, 4
    %v234 = vshll.u32 %v186, 16
    %v236 = vrot.slane %v234, 5
    %v237 = vsel %vm189, %v232, %v236
    %s238 = scalar_lea.vmem [#allocation7], 32
    %v239 = vld [vmem:[%s238] sm:$0xf]
    %v240 = vld [vmem:[%s238 + $0x4] sm:$0xf]
    %v241 = vld [vmem:[%s238 + $0x8] sm:$0xf]
    %v242 = vld [vmem:[%s238 + $0xc] sm:$0xf]
    %v243 = vld [vmem:[%s238 + $0x10] sm:$0xf]
    %v244 = vld [vmem:[%s238 + $0x14] sm:$0xf]
    %v245 = vld [vmem:[%s238 + $0x18] sm:$0xf]
    %v246 = vld [vmem:[%s238 + $0x1c] sm:$0xf]
    %v247 = vunpack.c.l.b16 %v203
    %v248 = vunpack.c.l.b16 %v213
    %v249 = vunpack.c.l.b16 %v227
    %v250 = vunpack.c.l.b16 %v237
    %v251 = vpack.c.b16 %v248, %v247
    %v252 = vpack.c.b16 %v250, %v249
    %v261 = vunpack.c.l.b16 %v239
    %v262 = vunpack.c.l.b16 %v240
    %v263 = vunpack.c.l.b16 %v241
    %v264 = vunpack.c.l.b16 %v242
    %v265 = vunpack.c.l.b16 %v243
    %v266 = vunpack.c.l.b16 %v244
    %v267 = vunpack.c.l.b16 %v245
    %v268 = vunpack.c.l.b16 %v246
    %v269 = vpack.c.b16 %v262, %v261
    %v270 = vpack.c.b16 %v264, %v263
    %v271 = vpack.c.b16 %v266, %v265
    %v272 = vpack.c.b16 %v268, %v267
    %vm277 = vcmask 523264
    %v279 = vsel %vm277, %v251, 0
    %v282 = vsel %vm277, %v252, 0
    %284 = vmatprep.subr.bf16.mxu0 0
    %285 = vmatpush1.bf16.msra.mxu0 0
    %286 = vmatprep.subr.bf16.mxu0 0
    %287 = vmatpush1.bf16.msra.mxu0 0
    %288 = vmatprep.subr.bf16.mxu0 0
    %289 = vmatpush1.bf16.msra.mxu0 0
    %290 = vmatprep.subr.bf16.mxu0 0
    %291 = vmatpush1.bf16.msra.mxu0 0
    %292 = vmatprep.subr.bf16.mxu0 0
    %293 = vmatpush1.bf16.msra.mxu0 %v272
    %294 = vmatprep.subr.bf16.mxu0 0
    %295 = vmatpush1.bf16.msra.mxu0 %v271
    %296 = vmatprep.subr.bf16.mxu0 0
    %297 = vmatpush1.bf16.msra.mxu0 %v270
    %298 = vmatprep.subr.bf16.mxu0 0
    %299 = vmatpush1.bf16.msra.mxu0 %v269
    %300 = vmatprep.subr.bf16.mxu0 0
    %301 = vmatpush2.bf16.msra.mxu0 0
    %302 = vmatprep.subr.bf16.mxu0 0
    %303 = vmatpush2.bf16.msra.mxu0 0
    %304 = vmatprep.subr.bf16.mxu0 0
    %305 = vmatpush2.bf16.msra.mxu0 0
    %306 = vmatprep.subr.bf16.mxu0 0
    %307 = vmatpush2.bf16.msra.mxu0 0
    %308 = vmatprep.subr.bf16.mxu0 0
    %309 = vmatpush2.bf16.msra.mxu0 0
    %310 = vmatprep.subr.bf16.mxu0 0
    %311 = vmatpush2.bf16.msra.mxu0 0
    %312 = vmatprep.subr.bf16.mxu0 0
    %313 = vmatpush2.bf16.msra.mxu0 0
    %314 = vmatprep.subr.bf16.mxu0 0
    %315 = vmatpush2.bf16.msra.mxu0 0
    %316 = vmatprep.mubr.bf16.mxu0 0
    %317 = vmatmul.mubr.bf16.gmra.mxu0 %v279
    %v318 = vpop.f32.mrf.mxu0
    %v319 = vadd.f32 0.0, %v318
    %v320 = vpop.f32.mrf.mxu0
    %v321 = vpop.f32.mrf.mxu0
    %v322 = vadd.f32 0.0, %v321
    %v323 = vpop.f32.mrf.mxu0
    %324 = vmatprep.mubr.bf16.mxu0 0
    %325 = vmatmul.mubr.bf16.gmra.mxu0 %v282
    %v326 = vpop.f32.mrf.mxu0
    %v327 = vadd.f32 0.0, %v326
    %v328 = vpop.f32.mrf.mxu0
    %v329 = vpop.f32.mrf.mxu0
    %v330 = vadd.f32 0.0, %v329
    %v331 = vpop.f32.mrf.mxu0
    %332 = vdwg.mxu0
    %v337 = vunpack.c.l.b16 %v173
    %v338 = vunpack.c.l.b16 %v174
    %v339 = vunpack.c.l.b16 %v175
    %v340 = vunpack.c.l.b16 %v176
    %v341 = vpack.c.b16 %v338, %v337
    %v342 = vpack.c.b16 %v340, %v339
    %v351 = vunpack.c.l.b16 %v177
    %v352 = vunpack.c.l.b16 %v178
    %v353 = vunpack.c.l.b16 %v179
    %v354 = vunpack.c.l.b16 %v180
    %v355 = vunpack.c.l.b16 %v181
    %v356 = vunpack.c.l.b16 %v182
    %v357 = vunpack.c.l.b16 %v183
    %v358 = vunpack.c.l.b16 %v184
    %v359 = vpack.c.b16 %v352, %v351
    %v360 = vpack.c.b16 %v354, %v353
    %v361 = vpack.c.b16 %v356, %v355
    %v362 = vpack.c.b16 %v358, %v357
    %v368 = vsel %vm277, %v341, 0
    %v371 = vsel %vm277, %v342, 0
    %373 = vmatprep.subr.bf16.mxu0 0
    %374 = vmatpush1.bf16.msra.mxu0 0
    %375 = vmatprep.subr.bf16.mxu0 0
    %376 = vmatpush1.bf16.msra.mxu0 0
    %377 = vmatprep.subr.bf16.mxu0 0
    %378 = vmatpush1.bf16.msra.mxu0 0
    %379 = vmatprep.subr.bf16.mxu0 0
    %380 = vmatpush1.bf16.msra.mxu0 0
    %381 = vmatprep.subr.bf16.mxu0 0
    %382 = vmatpush1.bf16.msra.mxu0 %v362
    %383 = vmatprep.subr.bf16.mxu0 0
    %384 = vmatpush1.bf16.msra.mxu0 %v361
    %385 = vmatprep.subr.bf16.mxu0 0
    %386 = vmatpush1.bf16.msra.mxu0 %v360
    %387 = vmatprep.subr.bf16.mxu0 0
    %388 = vmatpush1.bf16.msra.mxu0 %v359
    %389 = vmatprep.subr.bf16.mxu0 0
    %390 = vmatpush2.bf16.msra.mxu0 0
    %391 = vmatprep.subr.bf16.mxu0 0
    %392 = vmatpush2.bf16.msra.mxu0 0
    %393 = vmatprep.subr.bf16.mxu0 0
    %394 = vmatpush2.bf16.msra.mxu0 0
    %395 = vmatprep.subr.bf16.mxu0 0
    %396 = vmatpush2.bf16.msra.mxu0 0
    %397 = vmatprep.subr.bf16.mxu0 0
    %398 = vmatpush2.bf16.msra.mxu0 0
    %399 = vmatprep.subr.bf16.mxu0 0
    %400 = vmatpush2.bf16.msra.mxu0 0
    %401 = vmatprep.subr.bf16.mxu0 0
    %402 = vmatpush2.bf16.msra.mxu0 0
    %403 = vmatprep.subr.bf16.mxu0 0
    %404 = vmatpush2.bf16.msra.mxu0 0
    %405 = vmatprep.mubr.bf16.mxu0 0
    %406 = vmatmul.mubr.bf16.gmra.mxu0 %v368
    %v407 = vpop.f32.mrf.mxu0
    %v408 = vadd.f32 %v319, %v407
    %v409 = vpop.f32.mrf.mxu0
    %v410 = vpop.f32.mrf.mxu0
    %v411 = vadd.f32 %v322, %v410
    %v412 = vpop.f32.mrf.mxu0
    %413 = vmatprep.mubr.bf16.mxu0 0
    %414 = vmatmul.mubr.bf16.gmra.mxu0 %v371
    %v415 = vpop.f32.mrf.mxu0
    %v416 = vadd.f32 %v327, %v415
    %v417 = vpop.f32.mrf.mxu0
    %v418 = vpop.f32.mrf.mxu0
    %v419 = vadd.f32 %v330, %v418
    %v420 = vpop.f32.mrf.mxu0
    %421 = vdwg.mxu0
    %v422 = vld [vmem:[#allocation2] sm:$0xe]
    %v423 = vld [vmem:[#allocation2 + $0xc] sm:$0xe]
    %vm428 = vcmask 1042432
    %vm429 = vcmask 1046532
    %vm430 = vmor %vm428, %vm429
    %v431 = vrot.slane %v422, 5
    %v432 = vrot.slane %v431, 4
    %v433 = vrot.slane %v174, 5
    %v434 = vsel %vm430, %v432, %v433
    %v435 = vrot.slane %v433, 4
    %v436 = vrot.slane %v185, 5
    %v437 = vsel %vm430, %v435, %v436
    %v438 = vrot.slane %v423, 5
    %v439 = vrot.slane %v438, 4
    %v440 = vrot.slane %v176, 5
    %v441 = vsel %vm430, %v439, %v440
    %v442 = vrot.slane %v440, 4
    %v443 = vrot.slane %v186, 5
    %v444 = vsel %vm430, %v442, %v443
    %s445 = scalar_lea.vmem [#allocation7], 64
    %v446 = vld [vmem:[%s445] sm:$0xf]
    %v447 = vld [vmem:[%s445 + $0x4] sm:$0xf]
    %v448 = vld [vmem:[%s445 + $0x8] sm:$0xf]
    %v449 = vld [vmem:[%s445 + $0xc] sm:$0xf]
    %v450 = vld [vmem:[%s445 + $0x10] sm:$0xf]
    %v451 = vld [vmem:[%s445 + $0x14] sm:$0xf]
    %v452 = vld [vmem:[%s445 + $0x18] sm:$0xf]
    %v453 = vld [vmem:[%s445 + $0x1c] sm:$0xf]
    %v454 = vunpack.c.l.b16 %v434
    %v455 = vunpack.c.l.b16 %v437
    %v456 = vunpack.c.l.b16 %v441
    %v457 = vunpack.c.l.b16 %v444
    %v458 = vpack.c.b16 %v455, %v454
    %v459 = vpack.c.b16 %v457, %v456
    %v468 = vunpack.c.l.b16 %v446
    %v469 = vunpack.c.l.b16 %v447
    %v470 = vunpack.c.l.b16 %v448
    %v471 = vunpack.c.l.b16 %v449
    %v472 = vunpack.c.l.b16 %v450
    %v473 = vunpack.c.l.b16 %v451
    %v474 = vunpack.c.l.b16 %v452
    %v475 = vunpack.c.l.b16 %v453
    %v476 = vpack.c.b16 %v469, %v468
    %v477 = vpack.c.b16 %v471, %v470
    %v478 = vpack.c.b16 %v473, %v472
    %v479 = vpack.c.b16 %v475, %v474
    %v485 = vsel %vm277, %v458, 0
    %v488 = vsel %vm277, %v459, 0
    %490 = vmatprep.subr.bf16.mxu0 0
    %491 = vmatpush1.bf16.msra.mxu0 0
    %492 = vmatprep.subr.bf16.mxu0 0
    %493 = vmatpush1.bf16.msra.mxu0 0
    %494 = vmatprep.subr.bf16.mxu0 0
    %495 = vmatpush1.bf16.msra.mxu0 0
    %496 = vmatprep.subr.bf16.mxu0 0
    %497 = vmatpush1.bf16.msra.mxu0 0
    %498 = vmatprep.subr.bf16.mxu0 0
    %499 = vmatpush1.bf16.msra.mxu0 %v479
    %500 = vmatprep.subr.bf16.mxu0 0
    %501 = vmatpush1.bf16.msra.mxu0 %v478
    %502 = vmatprep.subr.bf16.mxu0 0
    %503 = vmatpush1.bf16.msra.mxu0 %v477
    %504 = vmatprep.subr.bf16.mxu0 0
    %505 = vmatpush1.bf16.msra.mxu0 %v476
    %506 = vmatprep.subr.bf16.mxu0 0
    %507 = vmatpush2.bf16.msra.mxu0 0
    %508 = vmatprep.subr.bf16.mxu0 0
    %509 = vmatpush2.bf16.msra.mxu0 0
    %510 = vmatprep.subr.bf16.mxu0 0
    %511 = vmatpush2.bf16.msra.mxu0 0
    %512 = vmatprep.subr.bf16.mxu0 0
    %513 = vmatpush2.bf16.msra.mxu0 0
    %514 = vmatprep.subr.bf16.mxu0 0
    %515 = vmatpush2.bf16.msra.mxu0 0
    %516 = vmatprep.subr.bf16.mxu0 0
    %517 = vmatpush2.bf16.msra.mxu0 0
    %518 = vmatprep.subr.bf16.mxu0 0
    %519 = vmatpush2.bf16.msra.mxu0 0
    %520 = vmatprep.subr.bf16.mxu0 0
    %521 = vmatpush2.bf16.msra.mxu0 0
    %522 = vmatprep.mubr.bf16.mxu0 0
    %523 = vmatmul.mubr.bf16.gmra.mxu0 %v485
    %v524 = vpop.f32.mrf.mxu0
    %v525 = vadd.f32 0.0, %v524
    %v526 = vpop.f32.mrf.mxu0
    %v527 = vpop.f32.mrf.mxu0
    %v528 = vadd.f32 0.0, %v527
    %v529 = vpop.f32.mrf.mxu0
    %530 = vmatprep.mubr.bf16.mxu0 0
    %531 = vmatmul.mubr.bf16.gmra.mxu0 %v488
    %v532 = vpop.f32.mrf.mxu0
    %v533 = vadd.f32 0.0, %v532
    %v534 = vpop.f32.mrf.mxu0
    %v535 = vpop.f32.mrf.mxu0
    %v536 = vadd.f32 0.0, %v535
    %v537 = vpop.f32.mrf.mxu0
    %538 = vdwg.mxu0
    %v539 = vadd.f32 %v408, %v525
    %v540 = vadd.f32 %v411, %v528
    %v541 = vadd.f32 %v416, %v533
    %v542 = vadd.f32 %v419, %v536
    %v543 = vld [vmem:[%s2] sm:$0x1]
    %v545 = vlaneseq
    %v546 = vshrl.u32 %v545, 7
    %v547 = vsub.s32 0, %v546
    %v548 = vrot.slane %v543, %v547
    %v550 = vmul.f32 %v539, %v548
    %v551 = vmul.f32 %v540, %v548
    %v552 = vmul.f32 %v541, %v548
    %v553 = vmul.f32 %v542, %v548
    %v554 = vld [vmem:[%s3] sm:$0x1]
    %v556 = vlaneseq
    %v557 = vshrl.u32 %v556, 7
    %v558 = vsub.s32 0, %v557
    %v559 = vrot.slane %v554, %v558
    %v561 = vadd.f32 %v550, %v559
    %v562 = vadd.f32 %v551, %v559
    %v563 = vadd.f32 %v552, %v559
    %v564 = vadd.f32 %v553, %v559
    %v565 = vmax.f32 %v561, 0.0
    %v566 = vmax.f32 %v562, 0.0
    %v567 = vmax.f32 %v563, 0.0
    %v568 = vmax.f32 %v564, 0.0
    %v569 = vpack.c.bf16 %v566, %v565
    %v570 = vpack.c.bf16 %v568, %v567
    %v573 = vunpack.c.l.b16 %v569
    %v574 = vunpack.c.h.b16 %v569
    %v575 = vunpack.c.l.b16 %v570
    %v576 = vunpack.c.h.b16 %v570
    %v577 = vpack.c.b16 %v573, %v573
    %v578 = vpack.c.b16 %v574, %v574
    %v579 = vpack.c.b16 %v575, %v575
    %v580 = vpack.c.b16 %v576, %v576
    %v582 = vshrl.u32 %v577, 16
    %v584 = vrot.slane %v582, 7
    %v585 = vshll.u32 %v577, 16
    %v587 = vor.u32 %v584, %v585
    %v588 = vrot.slane %v584, 4
    %v590 = vshrl.u32 %v578, 16
    %v592 = vrot.slane %v590, 7
    %v593 = vshll.u32 %v578, 16
    %v595 = vor.u32 %v592, %v593
    %v596 = vsel %vm115, %v588, %v595
    %v597 = vrot.slane %v592, 4
    %v599 = vshrl.u32 %v579, 16
    %v601 = vrot.slane %v599, 7
    %v602 = vshll.u32 %v579, 16
    %v604 = vor.u32 %v601, %v602
    %v605 = vrot.slane %v601, 4
    %v607 = vshrl.u32 %v580, 16
    %v609 = vrot.slane %v607, 7
    %v610 = vshll.u32 %v580, 16
    %v612 = vor.u32 %v609, %v610
    %v613 = vsel %vm115, %v605, %v612
    %v614 = vrot.slane %v609, 4
    %v621 = vld [vmem:[#allocation3] sm:$0xf]
    %v622 = vsel %vm157, %v587, %v621
    %623 = vst [vmem:[#allocation3] sm:$0xf] %v622
    %624 = vst.msk [vmem:[#allocation3 + $0x4] sm:$0xf] %vm161, %v596
    %v625 = vld [vmem:[#allocation3 + $0x8] sm:$0x1]
    %v626 = vsel %vm71, %v597, %v625
    %627 = vst [vmem:[#allocation3 + $0x8] sm:$0x1] %v626
    %v628 = vld [vmem:[#allocation3 + $0xc] sm:$0xf]
    %v629 = vsel %vm157, %v604, %v628
    %630 = vst [vmem:[#allocation3 + $0xc] sm:$0xf] %v629
    %631 = vst.msk [vmem:[#allocation3 + $0x10] sm:$0xf] %vm161, %v613
    %v632 = vld [vmem:[#allocation3 + $0x14] sm:$0x1]
    %v633 = vsel %vm71, %v614, %v632
    %634 = vst [vmem:[#allocation3 + $0x14] sm:$0x1] %v633
    %v635 = vld [vmem:[#allocation3] sm:$0xf]
    %v636 = vld [vmem:[#allocation3 + $0x4] sm:$0xf]
    %v637 = vld [vmem:[#allocation3 + $0xc] sm:$0xf]
    %v638 = vld [vmem:[#allocation3 + $0x10] sm:$0xf]
    %v639 = vld [vmem:[#allocation9] sm:$0xf]
    %v640 = vld [vmem:[#allocation9 + $0x4] sm:$0xf]
    %v641 = vld [vmem:[#allocation9 + $0x8] sm:$0xf]
    %v642 = vld [vmem:[#allocation9 + $0xc] sm:$0xf]
    %v643 = vld [vmem:[#allocation9 + $0x10] sm:$0xf]
    %v644 = vld [vmem:[#allocation9 + $0x14] sm:$0xf]
    %v645 = vld [vmem:[#allocation9 + $0x18] sm:$0xf]
    %v646 = vld [vmem:[#allocation9 + $0x1c] sm:$0xf]
    %v647 = vld [vmem:[#allocation3 + $0x8] sm:$0x1]
    %v648 = vld [vmem:[#allocation3 + $0x14] sm:$0x1]
    %v650 = vshrl.u32 %v635, 16
    %v652 = vrot.slane %v650, 4
    %v653 = vshll.u32 %v635, 16
    %v655 = vrot.slane %v653, 5
    %v656 = vor.u32 %v652, %v655
    %v657 = vrot.slane %v656, 4
    %v659 = vshll.u32 %v636, 16
    %v661 = vrot.slane %v659, 5
    %v662 = vsel %vm189, %v657, %v661
    %v663 = vshrl.u32 %v636, 16
    %v665 = vrot.slane %v663, 4
    %v666 = vor.u32 %v665, %v661
    %v667 = vrot.slane %v666, 4
    %v669 = vshll.u32 %v647, 16
    %v671 = vrot.slane %v669, 5
    %v672 = vsel %vm189, %v667, %v671
    %v674 = vshrl.u32 %v637, 16
    %v676 = vrot.slane %v674, 4
    %v677 = vshll.u32 %v637, 16
    %v679 = vrot.slane %v677, 5
    %v680 = vor.u32 %v676, %v679
    %v681 = vrot.slane %v680, 4
    %v683 = vshll.u32 %v638, 16
    %v685 = vrot.slane %v683, 5
    %v686 = vsel %vm189, %v681, %v685
    %v687 = vshrl.u32 %v638, 16
    %v689 = vrot.slane %v687, 4
    %v690 = vor.u32 %v689, %v685
    %v691 = vrot.slane %v690, 4
    %v693 = vshll.u32 %v648, 16
    %v695 = vrot.slane %v693, 5
    %v696 = vsel %vm189, %v691, %v695
    %s697 = scalar_lea.vmem [#allocation9], 32
    %v698 = vld [vmem:[%s697] sm:$0xf]
    %v699 = vld [vmem:[%s697 + $0x4] sm:$0xf]
    %v700 = vld [vmem:[%s697 + $0x8] sm:$0xf]
    %v701 = vld [vmem:[%s697 + $0xc] sm:$0xf]
    %v702 = vld [vmem:[%s697 + $0x10] sm:$0xf]
    %v703 = vld [vmem:[%s697 + $0x14] sm:$0xf]
    %v704 = vld [vmem:[%s697 + $0x18] sm:$0xf]
    %v705 = vld [vmem:[%s697 + $0x1c] sm:$0xf]
    %v706 = vunpack.c.l.b16 %v662
    %v707 = vunpack.c.l.b16 %v672
    %v708 = vunpack.c.l.b16 %v686
    %v709 = vunpack.c.l.b16 %v696
    %v710 = vpack.c.b16 %v707, %v706
    %v711 = vpack.c.b16 %v709, %v708
    %v720 = vunpack.c.l.b16 %v698
    %v721 = vunpack.c.l.b16 %v699
    %v722 = vunpack.c.l.b16 %v700
    %v723 = vunpack.c.l.b16 %v701
    %v724 = vunpack.c.l.b16 %v702
    %v725 = vunpack.c.l.b16 %v703
    %v726 = vunpack.c.l.b16 %v704
    %v727 = vunpack.c.l.b16 %v705
    %v728 = vpack.c.b16 %v721, %v720
    %v729 = vpack.c.b16 %v723, %v722
    %v730 = vpack.c.b16 %v725, %v724
    %v731 = vpack.c.b16 %v727, %v726
    %v737 = vsel %vm277, %v710, 0
    %v740 = vsel %vm277, %v711, 0
    %742 = vmatprep.subr.bf16.mxu0 0
    %743 = vmatpush1.bf16.msra.mxu0 0
    %744 = vmatprep.subr.bf16.mxu0 0
    %745 = vmatpush1.bf16.msra.mxu0 0
    %746 = vmatprep.subr.bf16.mxu0 0
    %747 = vmatpush1.bf16.msra.mxu0 0
    %748 = vmatprep.subr.bf16.mxu0 0
    %749 = vmatpush1.bf16.msra.mxu0 0
    %750 = vmatprep.subr.bf16.mxu0 0
    %751 = vmatpush1.bf16.msra.mxu0 %v731
    %752 = vmatprep.subr.bf16.mxu0 0
    %753 = vmatpush1.bf16.msra.mxu0 %v730
    %754 = vmatprep.subr.bf16.mxu0 0
    %755 = vmatpush1.bf16.msra.mxu0 %v729
    %756 = vmatprep.subr.bf16.mxu0 0
    %757 = vmatpush1.bf16.msra.mxu0 %v728
    %758 = vmatprep.subr.bf16.mxu0 0
    %759 = vmatpush2.bf16.msra.mxu0 0
    %760 = vmatprep.subr.bf16.mxu0 0
    %761 = vmatpush2.bf16.msra.mxu0 0
    %762 = vmatprep.subr.bf16.mxu0 0
    %763 = vmatpush2.bf16.msra.mxu0 0
    %764 = vmatprep.subr.bf16.mxu0 0
    %765 = vmatpush2.bf16.msra.mxu0 0
    %766 = vmatprep.subr.bf16.mxu0 0
    %767 = vmatpush2.bf16.msra.mxu0 0
    %768 = vmatprep.subr.bf16.mxu0 0
    %769 = vmatpush2.bf16.msra.mxu0 0
    %770 = vmatprep.subr.bf16.mxu0 0
    %771 = vmatpush2.bf16.msra.mxu0 0
    %772 = vmatprep.subr.bf16.mxu0 0
    %773 = vmatpush2.bf16.msra.mxu0 0
    %774 = vmatprep.mubr.bf16.mxu0 0
    %775 = vmatmul.mubr.bf16.gmra.mxu0 %v737
    %v776 = vpop.f32.mrf.mxu0
    %v777 = vadd.f32 0.0, %v776
    %v778 = vpop.f32.mrf.mxu0
    %v779 = vpop.f32.mrf.mxu0
    %v780 = vadd.f32 0.0, %v779
    %v781 = vpop.f32.mrf.mxu0
    %782 = vmatprep.mubr.bf16.mxu0 0
    %783 = vmatmul.mubr.bf16.gmra.mxu0 %v740
    %v784 = vpop.f32.mrf.mxu0
    %v785 = vadd.f32 0.0, %v784
    %v786 = vpop.f32.mrf.mxu0
    %v787 = vpop.f32.mrf.mxu0
    %v788 = vadd.f32 0.0, %v787
    %v789 = vpop.f32.mrf.mxu0
    %790 = vdwg.mxu0
    %v795 = vunpack.c.l.b16 %v635
    %v796 = vunpack.c.l.b16 %v636
    %v797 = vunpack.c.l.b16 %v637
    %v798 = vunpack.c.l.b16 %v638
    %v799 = vpack.c.b16 %v796, %v795
    %v800 = vpack.c.b16 %v798, %v797
    %v809 = vunpack.c.l.b16 %v639
    %v810 = vunpack.c.l.b16 %v640
    %v811 = vunpack.c.l.b16 %v641
    %v812 = vunpack.c.l.b16 %v642
    %v813 = vunpack.c.l.b16 %v643
    %v814 = vunpack.c.l.b16 %v644
    %v815 = vunpack.c.l.b16 %v645
    %v816 = vunpack.c.l.b16 %v646
    %v817 = vpack.c.b16 %v810, %v809
    %v818 = vpack.c.b16 %v812, %v811
    %v819 = vpack.c.b16 %v814, %v813
    %v820 = vpack.c.b16 %v816, %v815
    %v826 = vsel %vm277, %v799, 0
    %v829 = vsel %vm277, %v800, 0
    %831 = vmatprep.subr.bf16.mxu0 0
    %832 = vmatpush1.bf16.msra.mxu0 0
    %833 = vmatprep.subr.bf16.mxu0 0
    %834 = vmatpush1.bf16.msra.mxu0 0
    %835 = vmatprep.subr.bf16.mxu0 0
    %836 = vmatpush1.bf16.msra.mxu0 0
    %837 = vmatprep.subr.bf16.mxu0 0
    %838 = vmatpush1.bf16.msra.mxu0 0
    %839 = vmatprep.subr.bf16.mxu0 0
    %840 = vmatpush1.bf16.msra.mxu0 %v820
    %841 = vmatprep.subr.bf16.mxu0 0
    %842 = vmatpush1.bf16.msra.mxu0 %v819
    %843 = vmatprep.subr.bf16.mxu0 0
    %844 = vmatpush1.bf16.msra.mxu0 %v818
    %845 = vmatprep.subr.bf16.mxu0 0
    %846 = vmatpush1.bf16.msra.mxu0 %v817
    %847 = vmatprep.subr.bf16.mxu0 0
    %848 = vmatpush2.bf16.msra.mxu0 0
    %849 = vmatprep.subr.bf16.mxu0 0
    %850 = vmatpush2.bf16.msra.mxu0 0
    %851 = vmatprep.subr.bf16.mxu0 0
    %852 = vmatpush2.bf16.msra.mxu0 0
    %853 = vmatprep.subr.bf16.mxu0 0
    %854 = vmatpush2.bf16.msra.mxu0 0
    %855 = vmatprep.subr.bf16.mxu0 0
    %856 = vmatpush2.bf16.msra.mxu0 0
    %857 = vmatprep.subr.bf16.mxu0 0
    %858 = vmatpush2.bf16.msra.mxu0 0
    %859 = vmatprep.subr.bf16.mxu0 0
    %860 = vmatpush2.bf16.msra.mxu0 0
    %861 = vmatprep.subr.bf16.mxu0 0
    %862 = vmatpush2.bf16.msra.mxu0 0
    %863 = vmatprep.mubr.bf16.mxu0 0
    %864 = vmatmul.mubr.bf16.gmra.mxu0 %v826
    %v865 = vpop.f32.mrf.mxu0
    %v866 = vadd.f32 %v777, %v865
    %v867 = vpop.f32.mrf.mxu0
    %v868 = vpop.f32.mrf.mxu0
    %v869 = vadd.f32 %v780, %v868
    %v870 = vpop.f32.mrf.mxu0
    %871 = vmatprep.mubr.bf16.mxu0 0
    %872 = vmatmul.mubr.bf16.gmra.mxu0 %v829
    %v873 = vpop.f32.mrf.mxu0
    %v874 = vadd.f32 %v785, %v873
    %v875 = vpop.f32.mrf.mxu0
    %v876 = vpop.f32.mrf.mxu0
    %v877 = vadd.f32 %v788, %v876
    %v878 = vpop.f32.mrf.mxu0
    %879 = vdwg.mxu0
    %v880 = vld [vmem:[#allocation3] sm:$0xe]
    %v881 = vld [vmem:[#allocation3 + $0xc] sm:$0xe]
    %v886 = vrot.slane %v880, 5
    %v887 = vrot.slane %v886, 4
    %v888 = vrot.slane %v636, 5
    %v889 = vsel %vm430, %v887, %v888
    %v890 = vrot.slane %v888, 4
    %v891 = vrot.slane %v647, 5
    %v892 = vsel %vm430, %v890, %v891
    %v893 = vrot.slane %v881, 5
    %v894 = vrot.slane %v893, 4
    %v895 = vrot.slane %v638, 5
    %v896 = vsel %vm430, %v894, %v895
    %v897 = vrot.slane %v895, 4
    %v898 = vrot.slane %v648, 5
    %v899 = vsel %vm430, %v897, %v898
    %s900 = scalar_lea.vmem [#allocation9], 64
    %v901 = vld [vmem:[%s900] sm:$0xf]
    %v902 = vld [vmem:[%s900 + $0x4] sm:$0xf]
    %v903 = vld [vmem:[%s900 + $0x8] sm:$0xf]
    %v904 = vld [vmem:[%s900 + $0xc] sm:$0xf]
    %v905 = vld [vmem:[%s900 + $0x10] sm:$0xf]
    %v906 = vld [vmem:[%s900 + $0x14] sm:$0xf]
    %v907 = vld [vmem:[%s900 + $0x18] sm:$0xf]
    %v908 = vld [vmem:[%s900 + $0x1c] sm:$0xf]
    %v909 = vunpack.c.l.b16 %v889
    %v910 = vunpack.c.l.b16 %v892
    %v911 = vunpack.c.l.b16 %v896
    %v912 = vunpack.c.l.b16 %v899
    %v913 = vpack.c.b16 %v910, %v909
    %v914 = vpack.c.b16 %v912, %v911
    %v923 = vunpack.c.l.b16 %v901
    %v924 = vunpack.c.l.b16 %v902
    %v925 = vunpack.c.l.b16 %v903
    %v926 = vunpack.c.l.b16 %v904
    %v927 = vunpack.c.l.b16 %v905
    %v928 = vunpack.c.l.b16 %v906
    %v929 = vunpack.c.l.b16 %v907
    %v930 = vunpack.c.l.b16 %v908
    %v931 = vpack.c.b16 %v924, %v923
    %v932 = vpack.c.b16 %v926, %v925
    %v933 = vpack.c.b16 %v928, %v927
    %v934 = vpack.c.b16 %v930, %v929
    %v940 = vsel %vm277, %v913, 0
    %v943 = vsel %vm277, %v914, 0
    %945 = vmatprep.subr.bf16.mxu0 0
    %946 = vmatpush1.bf16.msra.mxu0 0
    %947 = vmatprep.subr.bf16.mxu0 0
    %948 = vmatpush1.bf16.msra.mxu0 0
    %949 = vmatprep.subr.bf16.mxu0 0
    %950 = vmatpush1.bf16.msra.mxu0 0
    %951 = vmatprep.subr.bf16.mxu0 0
    %952 = vmatpush1.bf16.msra.mxu0 0
    %953 = vmatprep.subr.bf16.mxu0 0
    %954 = vmatpush1.bf16.msra.mxu0 %v934
    %955 = vmatprep.subr.bf16.mxu0 0
    %956 = vmatpush1.bf16.msra.mxu0 %v933
    %957 = vmatprep.subr.bf16.mxu0 0
    %958 = vmatpush1.bf16.msra.mxu0 %v932
    %959 = vmatprep.subr.bf16.mxu0 0
    %960 = vmatpush1.bf16.msra.mxu0 %v931
    %961 = vmatprep.subr.bf16.mxu0 0
    %962 = vmatpush2.bf16.msra.mxu0 0
    %963 = vmatprep.subr.bf16.mxu0 0
    %964 = vmatpush2.bf16.msra.mxu0 0
    %965 = vmatprep.subr.bf16.mxu0 0
    %966 = vmatpush2.bf16.msra.mxu0 0
    %967 = vmatprep.subr.bf16.mxu0 0
    %968 = vmatpush2.bf16.msra.mxu0 0
    %969 = vmatprep.subr.bf16.mxu0 0
    %970 = vmatpush2.bf16.msra.mxu0 0
    %971 = vmatprep.subr.bf16.mxu0 0
    %972 = vmatpush2.bf16.msra.mxu0 0
    %973 = vmatprep.subr.bf16.mxu0 0
    %974 = vmatpush2.bf16.msra.mxu0 0
    %975 = vmatprep.subr.bf16.mxu0 0
    %976 = vmatpush2.bf16.msra.mxu0 0
    %977 = vmatprep.mubr.bf16.mxu0 0
    %978 = vmatmul.mubr.bf16.gmra.mxu0 %v940
    %v979 = vpop.f32.mrf.mxu0
    %v980 = vadd.f32 0.0, %v979
    %v981 = vpop.f32.mrf.mxu0
    %v982 = vpop.f32.mrf.mxu0
    %v983 = vadd.f32 0.0, %v982
    %v984 = vpop.f32.mrf.mxu0
    %985 = vmatprep.mubr.bf16.mxu0 0
    %986 = vmatmul.mubr.bf16.gmra.mxu0 %v943
    %v987 = vpop.f32.mrf.mxu0
    %v988 = vadd.f32 0.0, %v987
    %v989 = vpop.f32.mrf.mxu0
    %v990 = vpop.f32.mrf.mxu0
    %v991 = vadd.f32 0.0, %v990
    %v992 = vpop.f32.mrf.mxu0
    %993 = vdwg.mxu0
    %v994 = vadd.f32 %v866, %v980
    %v995 = vadd.f32 %v869, %v983
    %v996 = vadd.f32 %v874, %v988
    %v997 = vadd.f32 %v877, %v991
    %v998 = vld [vmem:[%s5] sm:$0x1]
    %v1000 = vlaneseq
    %v1001 = vshrl.u32 %v1000, 7
    %v1002 = vsub.s32 0, %v1001
    %v1003 = vrot.slane %v998, %v1002
    %v1005 = vmul.f32 %v994, %v1003
    %v1006 = vmul.f32 %v995, %v1003
    %v1007 = vmul.f32 %v996, %v1003
    %v1008 = vmul.f32 %v997, %v1003
    %v1009 = vld [vmem:[%s6] sm:$0x1]
    %v1011 = vlaneseq
    %v1012 = vshrl.u32 %v1011, 7
    %v1013 = vsub.s32 0, %v1012
    %v1014 = vrot.slane %v1009, %v1013
    %v1016 = vadd.f32 %v1005, %v1014
    %v1017 = vadd.f32 %v1006, %v1014
    %v1018 = vadd.f32 %v1007, %v1014
    %v1019 = vadd.f32 %v1008, %v1014
    %v1020 = vld [vmem:[#allocation4] sm:$0xff]
    %v1021 = vld [vmem:[#allocation4 + $0x8] sm:$0xff]
    %v1022 = vld [vmem:[#allocation4 + $0x10] sm:$0xff]
    %v1023 = vld [vmem:[#allocation4 + $0x18] sm:$0xff]
    %v1024 = vadd.f32 %v1016, %v1020
    %v1025 = vadd.f32 %v1017, %v1021
    %v1026 = vadd.f32 %v1018, %v1022
    %v1027 = vadd.f32 %v1019, %v1023
    %v1028 = vmax.f32 %v1024, 0.0
    %v1029 = vmax.f32 %v1025, 0.0
    %v1030 = vmax.f32 %v1026, 0.0
    %v1031 = vmax.f32 %v1027, 0.0
    %1032 = vst.msk [vmem:[#allocation10] sm:$0xff] %vm277, %v1028
    %1033 = vst.msk [vmem:[#allocation10 + $0x8] sm:$0xff] %vm277, %v1029
    %1034 = vst.msk [vmem:[#allocation10 + $0x10] sm:$0xff] %vm277, %v1030
    %1035 = vst.msk [vmem:[#allocation10 + $0x18] sm:$0xff] %vm277, %v1031
    // Predicated region
    $region42: #{tpu_custom_call.1} parent=1 // pred_check
      _
    $region43: #{tpu_custom_call.1} parent=1 // pred_check_branch
      %1037 = sbr.rel (0) target = $region45
    $region44: #{tpu_custom_call.1} parent=1 // pred_region
      %s1039 = ssub.s32 512, 512
      %1040 = vsyncadd [#allocation6], %s1039
      %s1041 = sshll.u32 [#allocation10], 4
      %s1042 = int_to_ptr.vmem [resolvable:$true] %s1041
      %1047 = dma.vmem_to_hbm [thread:$0]  %s1042, 512, %s7, [#allocation6], 128, 128, 8
    $region45: #{tpu_custom_call.1} parent=1 // pred_fallthru
      _
    // Predicated region
    $region46: #{tpu_custom_call.1} parent=1 // pred_check
      _
    $region47: #{tpu_custom_call.1} parent=1 // pred_check_branch
      %1049 = sbr.rel (0) target = $region49
    $region48: #{tpu_custom_call.1} parent=1 // pred_region
      %1050 = dma.done [#allocation6], 512
    $region49: #{tpu_custom_call.1} parent=1 // pred_fallthru
      _
    %1051 = vsyncpa [#allocation5], 1
    %1052 = vsyncpa [#allocation8], 1
    %1053 = vsyncpa [#allocation6], 1

</llo_original>
